<compile_context>
chip_gen: v7x
topology: tpu7x:2x2x1
jax: 0.10.0
libtpu: 0.0.40
codegen_flags: <defaults>
</compile_context>

<pallas_src>
import functools

import jax
import jax.numpy as jnp
from jax import lax
from jax.experimental import pallas as pl
from jax.experimental.pallas import tpu as pltpu

LANE = 128
MAX_BLOCK_ROWS = 2048      # (2048, 128) f32 block = 1 MiB per input buffer
NUM_PARTITIONS = 2         # v7x has 2 TensorCores; extra partition is harmless elsewhere


def _dice_bce_kernel(x_ref, y_ref, bce_out, xy_out, xpy_out,
                     acc_bce, acc_xy, acc_xpy, *, n_valid, nb_per):
    p = pl.program_id(0)   # partition axis ("parallel")
    i = pl.program_id(1)   # reduction axis within partition ("arbitrary")

    @pl.when(i == 0)
    def _init():
        acc_bce[...] = jnp.zeros_like(acc_bce)
        acc_xy[...] = jnp.zeros_like(acc_xy)
        acc_xpy[...] = jnp.zeros_like(acc_xpy)

    block_rows, lane = x_ref.shape

    # Global element ids from the *logical* (unclamped) block index; used to
    # zero out (a) lane padding, (b) rows past the end of the data in the last
    # block, and (c) whole duplicate blocks read by a partition whose range
    # extends past the data. int32 indices are fine for < 2**31 elements.
    blk = p * nb_per + i
    base = blk * (block_rows * lane)
    row_io = lax.broadcasted_iota(jnp.int32, (block_rows, lane), 0)
    col_io = lax.broadcasted_iota(jnp.int32, (block_rows, lane), 1)
    mask = (base + row_io * lane + col_io) < n_valid

    x = jnp.where(mask, x_ref[...].astype(jnp.float32), 0.0)
    y = jnp.where(mask, y_ref[...].astype(jnp.float32), 0.0)

    # torch.nn.BCELoss clamps the log terms at -100.
    log_x = jnp.maximum(jnp.log(x), -100.0)
    log_1mx = jnp.maximum(jnp.log(1.0 - x), -100.0)
    bce = jnp.where(mask, -(y * log_x + (1.0 - y) * log_1mx), 0.0)

    # Pure VPU elementwise accumulation (no per-step XLU reductions).
    acc_bce[...] += bce
    acc_xy[...] += x * y
    acc_xpy[...] += x + y

    @pl.when(i == pl.num_programs(1) - 1)
    def _finalize():
        bce_out[0] = jnp.sum(acc_bce[...], keepdims=True)
        xy_out[0] = jnp.sum(acc_xy[...], keepdims=True)
        xpy_out[0] = jnp.sum(acc_xpy[...], keepdims=True)


def dice_bce_loss(inputs, targets, *, weight=1.0, epsilon=1.0):
    x = inputs.reshape(-1)
    y = targets.reshape(-1)
    n = x.shape[0]

    # Lane alignment only; skipped entirely when numel % 128 == 0 (the common
    # case), so no full-array HBM rewrite happens before the kernel.
    pad = (-n) % LANE
    if pad:
        x = jnp.pad(x, (0, pad))
        y = jnp.pad(y, (0, pad))
    rows = (n + pad) // LANE
    x2 = x.reshape(rows, LANE)
    y2 = y.reshape(rows, LANE)

    # Full-extent block when the whole thing fits in one tile, else (2048,128).
    block_rows = rows if rows <= MAX_BLOCK_ROWS else MAX_BLOCK_ROWS
    nb = pl.cdiv(rows, block_rows)            # total row-blocks
    nb_per = pl.cdiv(nb, NUM_PARTITIONS)      # row-blocks per partition
    grid = (NUM_PARTITIONS, nb_per)

    def in_map(p, i):
        # Clamp: partitions whose tail iterations fall past the data re-read the
        # last valid block; their contribution is zeroed by the in-kernel mask.
        return (jnp.minimum(p * nb_per + i, nb - 1), 0)

    def out_map(p, i):
        return (p, 0, 0)

    kernel = functools.partial(_dice_bce_kernel, n_valid=n, nb_per=nb_per)

    part = jax.ShapeDtypeStruct((NUM_PARTITIONS, 1, 1), jnp.float32)
    sums = pl.pallas_call(
        kernel,
        out_shape=[part, part, part],
        grid_spec=pltpu.PrefetchScalarGridSpec(
            num_scalar_prefetch=0,
            grid=grid,
            in_specs=[pl.BlockSpec((block_rows, LANE), in_map),
                      pl.BlockSpec((block_rows, LANE), in_map)],
            out_specs=[pl.BlockSpec((1, 1, 1), out_map)] * 3,
            scratch_shapes=[pltpu.VMEM((block_rows, LANE), jnp.float32)] * 3,
        ),
        compiler_params=pltpu.CompilerParams(
            dimension_semantics=("parallel", "arbitrary")),
    )(x2, y2)

    sum_bce = jnp.sum(sums[0])
    sum_xy = jnp.sum(sums[1])
    sum_xpy = jnp.sum(sums[2])

    bce_mean = (weight / n) * sum_bce
    dice = (2.0 * sum_xy + epsilon) / (sum_xpy + epsilon)
    return bce_mean + (1.0 - dice)


def _reference_loss(inputs, targets, weight, epsilon):
    x = inputs.reshape(-1).astype(jnp.float32)
    y = targets.reshape(-1).astype(jnp.float32)
    bce = -(weight * (y * jnp.log(x) + (1.0 - y) * jnp.log(1.0 - x))).mean()
    inter = (x * y).sum()
    dice = (2.0 * inter + epsilon) / (x.sum() + y.sum() + epsilon)
    return bce + (1.0 - dice)


if __name__ == "__main__":
    # The torch module's default weight=None would crash (torch.tensor(None));
    # pick a deterministic scalar weight in-script (BCELoss weight broadcasts).
    WEIGHT = 0.7
    EPSILON = 1.0

    B, C, H, W = 2, 4, 16, 16
    key = jax.random.PRNGKey(0)
    k1, k2 = jax.random.split(key)
    # Predictions must be probabilities in (0, 1) for BCELoss.
    inputs = jax.nn.sigmoid(jax.random.normal(k1, (B, C, H, W), jnp.float32))
    targets = (jax.random.uniform(k2, (B, C, H, W)) > 0.5).astype(jnp.float32)

    loss = dice_bce_loss(inputs, targets, weight=WEIGHT, epsilon=EPSILON)
    loss = jax.block_until_ready(loss)

    ref = _reference_loss(inputs, targets, WEIGHT, EPSILON)
    assert jnp.allclose(loss, ref, rtol=1e-5, atol=1e-5), (loss, ref)

    print("KERNEL_OK")
</pallas_src>

<mosaic_0001>
module attributes {stable_mosaic.version = 11 : i64} {
  func.func @_dice_bce_kernel(%arg0: i32, %arg1: i32, %arg2: memref<16x128xf32, #tpu.memory_space<vmem>>, %arg3: memref<16x128xf32, #tpu.memory_space<vmem>>, %arg4: memref<1x1x1xf32, #tpu.memory_space<vmem>>, %arg5: memref<1x1x1xf32, #tpu.memory_space<vmem>>, %arg6: memref<1x1x1xf32, #tpu.memory_space<vmem>>, %arg7: memref<16x128xf32, #tpu.memory_space<vmem>>, %arg8: memref<16x128xf32, #tpu.memory_space<vmem>>, %arg9: memref<16x128xf32, #tpu.memory_space<vmem>>) attributes {dimension_semantics = [#tpu.dimension_semantics<parallel>, #tpu.dimension_semantics<arbitrary>], iteration_bounds = array<i64: 2, 1>, scalar_prefetch = 0 : i64, scratch_operands = 3 : i64, tpu.core_type = #tpu.core_type<tc>, window_params = [{transform_indices = @transform_0, window_bounds = array<i64: 16, 128>}, {transform_indices = @transform_1, window_bounds = array<i64: 16, 128>}, {transform_indices = @transform_2, window_bounds = array<i64: 1, 1, 1>}, {transform_indices = @transform_3, window_bounds = array<i64: 1, 1, 1>}, {transform_indices = @transform_4, window_bounds = array<i64: 1, 1, 1>}]} {
    %c0_i32 = arith.constant 0 : i32
    %0 = arith.cmpi eq, %arg1, %c0_i32 : i32
    %1 = arith.extui %0 : i1 to i32
    %c0_i32_0 = arith.constant 0 : i32
    %2 = arith.cmpi ne, %1, %c0_i32_0 : i32
    scf.if %2 {
      %cst_26 = arith.constant 0.000000e+00 : f32
      %52 = vector.broadcast %cst_26 : f32 to vector<16x128xf32>
      %c0_27 = arith.constant 0 : index
      %c0_28 = arith.constant 0 : index
      %53 = vector.load %arg7[%c0_27, %c0_28] : memref<16x128xf32, #tpu.memory_space<vmem>>, vector<16x128xf32>
      tpu.vector_store %arg7[%c0_27, %c0_28], %52 {strides = array<i32>} : memref<16x128xf32, #tpu.memory_space<vmem>>, vector<16x128xf32>,
      %cst_29 = arith.constant 0.000000e+00 : f32
      %54 = vector.broadcast %cst_29 : f32 to vector<16x128xf32>
      %c0_30 = arith.constant 0 : index
      %c0_31 = arith.constant 0 : index
      %55 = vector.load %arg8[%c0_30, %c0_31] : memref<16x128xf32, #tpu.memory_space<vmem>>, vector<16x128xf32>
      tpu.vector_store %arg8[%c0_30, %c0_31], %54 {strides = array<i32>} : memref<16x128xf32, #tpu.memory_space<vmem>>, vector<16x128xf32>,
      %cst_32 = arith.constant 0.000000e+00 : f32
      %56 = vector.broadcast %cst_32 : f32 to vector<16x128xf32>
      %c0_33 = arith.constant 0 : index
      %c0_34 = arith.constant 0 : index
      %57 = vector.load %arg9[%c0_33, %c0_34] : memref<16x128xf32, #tpu.memory_space<vmem>>, vector<16x128xf32>
      tpu.vector_store %arg9[%c0_33, %c0_34], %56 {strides = array<i32>} : memref<16x128xf32, #tpu.memory_space<vmem>>, vector<16x128xf32>,
    } else {
    }
    %c1_i32 = arith.constant 1 : i32
    %3 = arith.muli %arg0, %c1_i32 : i32
    %4 = arith.addi %3, %arg1 : i32
    %c2048_i32 = arith.constant 2048 : i32
    %5 = arith.muli %4, %c2048_i32 : i32
    %6 = tpu.iota {dimensions = array<i32: 0>} : vector<16x128xi32>
    %7 = tpu.iota {dimensions = array<i32: 1>} : vector<16x128xi32>
    %c128_i32 = arith.constant 128 : i32
    %8 = vector.broadcast %c128_i32 : i32 to vector<16x128xi32>
    %9 = arith.muli %6, %8 : vector<16x128xi32>
    %10 = vector.broadcast %5 : i32 to vector<16x128xi32>
    %11 = arith.addi %10, %9 : vector<16x128xi32>
    %12 = arith.addi %11, %7 : vector<16x128xi32>
    %c2048_i32_1 = arith.constant 2048 : i32
    %13 = vector.broadcast %c2048_i32_1 : i32 to vector<16x128xi32>
    %14 = arith.cmpi slt, %12, %13 : vector<16x128xi32>
    %c0 = arith.constant 0 : index
    %c0_2 = arith.constant 0 : index
    %15 = vector.load %arg2[%c0, %c0_2] : memref<16x128xf32, #tpu.memory_space<vmem>>, vector<16x128xf32>
    %cst = arith.constant 0.000000e+00 : f32
    %16 = vector.broadcast %cst : f32 to vector<16x128xf32>
    %17 = arith.select %14, %15, %16 : vector<16x128xi1>, vector<16x128xf32>
    %c0_3 = arith.constant 0 : index
    %c0_4 = arith.constant 0 : index
    %18 = vector.load %arg3[%c0_3, %c0_4] : memref<16x128xf32, #tpu.memory_space<vmem>>, vector<16x128xf32>
    %cst_5 = arith.constant 0.000000e+00 : f32
    %19 = vector.broadcast %cst_5 : f32 to vector<16x128xf32>
    %20 = arith.select %14, %18, %19 : vector<16x128xi1>, vector<16x128xf32>
    %21 = math.log %17 : vector<16x128xf32>
    %cst_6 = arith.constant -1.000000e+02 : f32
    %22 = vector.broadcast %cst_6 : f32 to vector<16x128xf32>
    %23 = arith.maximumf %21, %22 : vector<16x128xf32>
    %cst_7 = arith.constant 1.000000e+00 : f32
    %24 = vector.broadcast %cst_7 : f32 to vector<16x128xf32>
    %25 = arith.subf %24, %17 : vector<16x128xf32>
    %26 = math.log %25 : vector<16x128xf32>
    %cst_8 = arith.constant -1.000000e+02 : f32
    %27 = vector.broadcast %cst_8 : f32 to vector<16x128xf32>
    %28 = arith.maximumf %26, %27 : vector<16x128xf32>
    %29 = arith.mulf %20, %23 : vector<16x128xf32>
    %cst_9 = arith.constant 1.000000e+00 : f32
    %30 = vector.broadcast %cst_9 : f32 to vector<16x128xf32>
    %31 = arith.subf %30, %20 : vector<16x128xf32>
    %32 = arith.mulf %31, %28 : vector<16x128xf32>
    %33 = arith.addf %29, %32 : vector<16x128xf32>
    %cst_10 = arith.constant 0.000000e+00 : f32
    %34 = vector.broadcast %cst_10 : f32 to vector<16x128xf32>
    %35 = arith.subf %34, %33 : vector<16x128xf32>
    %cst_11 = arith.constant 0.000000e+00 : f32
    %36 = vector.broadcast %cst_11 : f32 to vector<16x128xf32>
    %37 = arith.select %14, %35, %36 : vector<16x128xi1>, vector<16x128xf32>
    %c0_12 = arith.constant 0 : index
    %c0_13 = arith.constant 0 : index
    %38 = vector.load %arg7[%c0_12, %c0_13] : memref<16x128xf32, #tpu.memory_space<vmem>>, vector<16x128xf32>
    %39 = arith.addf %38, %37 : vector<16x128xf32>
    %c0_14 = arith.constant 0 : index
    %c0_15 = arith.constant 0 : index
    %40 = vector.load %arg7[%c0_14, %c0_15] : memref<16x128xf32, #tpu.memory_space<vmem>>, vector<16x128xf32>
    tpu.vector_store %arg7[%c0_14, %c0_15], %39 {strides = array<i32>} : memref<16x128xf32, #tpu.memory_space<vmem>>, vector<16x128xf32>,
    %c0_16 = arith.constant 0 : index
    %c0_17 = arith.constant 0 : index
    %41 = vector.load %arg8[%c0_16, %c0_17] : memref<16x128xf32, #tpu.memory_space<vmem>>, vector<16x128xf32>
    %42 = arith.mulf %17, %20 : vector<16x128xf32>
    %43 = arith.addf %41, %42 : vector<16x128xf32>
    %c0_18 = arith.constant 0 : index
    %c0_19 = arith.constant 0 : index
    %44 = vector.load %arg8[%c0_18, %c0_19] : memref<16x128xf32, #tpu.memory_space<vmem>>, vector<16x128xf32>
    tpu.vector_store %arg8[%c0_18, %c0_19], %43 {strides = array<i32>} : memref<16x128xf32, #tpu.memory_space<vmem>>, vector<16x128xf32>,
    %c0_20 = arith.constant 0 : index
    %c0_21 = arith.constant 0 : index
    %45 = vector.load %arg9[%c0_20, %c0_21] : memref<16x128xf32, #tpu.memory_space<vmem>>, vector<16x128xf32>
    %46 = arith.addf %17, %20 : vector<16x128xf32>
    %47 = arith.addf %45, %46 : vector<16x128xf32>
    %c0_22 = arith.constant 0 : index
    %c0_23 = arith.constant 0 : index
    %48 = vector.load %arg9[%c0_22, %c0_23] : memref<16x128xf32, #tpu.memory_space<vmem>>, vector<16x128xf32>
    tpu.vector_store %arg9[%c0_22, %c0_23], %47 {strides = array<i32>} : memref<16x128xf32, #tpu.memory_space<vmem>>, vector<16x128xf32>,
    %c0_i32_24 = arith.constant 0 : i32
    %49 = arith.cmpi eq, %arg1, %c0_i32_24 : i32
    %50 = arith.extui %49 : i1 to i32
    %c0_i32_25 = arith.constant 0 : i32
    %51 = arith.cmpi ne, %50, %c0_i32_25 : i32
    scf.if %51 {
      %c0_26 = arith.constant 0 : index
      %c0_27 = arith.constant 0 : index
      %52 = vector.load %arg7[%c0_26, %c0_27] : memref<16x128xf32, #tpu.memory_space<vmem>>, vector<16x128xf32>
      %53 = vector.shape_cast %52 : vector<16x128xf32> to vector<1x16x128xf32>
      %cst_28 = arith.constant dense<0.000000e+00> : vector<1xf32>
      %54 = vector.multi_reduction <add>, %53, %cst_28 [1, 2] : vector<1x16x128xf32> to vector<1xf32>
      %55 = vector.shape_cast %54 : vector<1xf32> to vector<1x1x1xf32>
      %56 = vector.extract %55[0, 0, 0] : f32 from vector<1x1x1xf32>
      %57 = vector.broadcast %56 : f32 to vector<1x1xf32>
      %c0_29 = arith.constant 0 : index
      %c0_30 = arith.constant 0 : index
      %c0_31 = arith.constant 0 : index
      %58 = vector.load %arg4[%c0_29, %c0_30, %c0_31] : memref<1x1x1xf32, #tpu.memory_space<vmem>>, vector<1x1x1xf32>
      %59 = vector.shape_cast %58 : vector<1x1x1xf32> to vector<1x1xf32>
      %60 = vector.shape_cast %57 : vector<1x1xf32> to vector<1x1x1xf32>
      tpu.vector_store %arg4[%c0_29, %c0_30, %c0_31], %60 {strides = array<i32>} : memref<1x1x1xf32, #tpu.memory_space<vmem>>, vector<1x1x1xf32>,
      %c0_32 = arith.constant 0 : index
      %c0_33 = arith.constant 0 : index
      %61 = vector.load %arg8[%c0_32, %c0_33] : memref<16x128xf32, #tpu.memory_space<vmem>>, vector<16x128xf32>
      %62 = vector.shape_cast %61 : vector<16x128xf32> to vector<1x16x128xf32>
      %cst_34 = arith.constant dense<0.000000e+00> : vector<1xf32>
      %63 = vector.multi_reduction <add>, %62, %cst_34 [1, 2] : vector<1x16x128xf32> to vector<1xf32>
      %64 = vector.shape_cast %63 : vector<1xf32> to vector<1x1x1xf32>
      %65 = vector.extract %64[0, 0, 0] : f32 from vector<1x1x1xf32>
      %66 = vector.broadcast %65 : f32 to vector<1x1xf32>
      %c0_35 = arith.constant 0 : index
      %c0_36 = arith.constant 0 : index
      %c0_37 = arith.constant 0 : index
      %67 = vector.load %arg5[%c0_35, %c0_36, %c0_37] : memref<1x1x1xf32, #tpu.memory_space<vmem>>, vector<1x1x1xf32>
      %68 = vector.shape_cast %67 : vector<1x1x1xf32> to vector<1x1xf32>
      %69 = vector.shape_cast %66 : vector<1x1xf32> to vector<1x1x1xf32>
      tpu.vector_store %arg5[%c0_35, %c0_36, %c0_37], %69 {strides = array<i32>} : memref<1x1x1xf32, #tpu.memory_space<vmem>>, vector<1x1x1xf32>,
      %c0_38 = arith.constant 0 : index
      %c0_39 = arith.constant 0 : index
      %70 = vector.load %arg9[%c0_38, %c0_39] : memref<16x128xf32, #tpu.memory_space<vmem>>, vector<16x128xf32>
      %71 = vector.shape_cast %70 : vector<16x128xf32> to vector<1x16x128xf32>
      %cst_40 = arith.constant dense<0.000000e+00> : vector<1xf32>
      %72 = vector.multi_reduction <add>, %71, %cst_40 [1, 2] : vector<1x16x128xf32> to vector<1xf32>
      %73 = vector.shape_cast %72 : vector<1xf32> to vector<1x1x1xf32>
      %74 = vector.extract %73[0, 0, 0] : f32 from vector<1x1x1xf32>
      %75 = vector.broadcast %74 : f32 to vector<1x1xf32>
      %c0_41 = arith.constant 0 : index
      %c0_42 = arith.constant 0 : index
      %c0_43 = arith.constant 0 : index
      %76 = vector.load %arg6[%c0_41, %c0_42, %c0_43] : memref<1x1x1xf32, #tpu.memory_space<vmem>>, vector<1x1x1xf32>
      %77 = vector.shape_cast %76 : vector<1x1x1xf32> to vector<1x1xf32>
      %78 = vector.shape_cast %75 : vector<1x1xf32> to vector<1x1x1xf32>
      tpu.vector_store %arg6[%c0_41, %c0_42, %c0_43], %78 {strides = array<i32>} : memref<1x1x1xf32, #tpu.memory_space<vmem>>, vector<1x1x1xf32>,
    } else {
    }
    return
  }
  func.func @transform_0(%arg0: i32, %arg1: i32) -> (i32, i32) {
    %c1_i32 = arith.constant 1 : i32
    %0 = arith.muli %arg0, %c1_i32 : i32
    %1 = arith.addi %0, %arg1 : i32
    %c0_i32 = arith.constant 0 : i32
    %2 = arith.minsi %1, %c0_i32 : i32
    %c0_i32_0 = arith.constant 0 : i32
    %c0_i32_1 = arith.constant 0 : i32
    return %2, %c0_i32_0 : i32, i32
  }
  func.func @transform_1(%arg0: i32, %arg1: i32) -> (i32, i32) {
    %c1_i32 = arith.constant 1 : i32
    %0 = arith.muli %arg0, %c1_i32 : i32
    %1 = arith.addi %0, %arg1 : i32
    %c0_i32 = arith.constant 0 : i32
    %2 = arith.minsi %1, %c0_i32 : i32
    %c0_i32_0 = arith.constant 0 : i32
    %c0_i32_1 = arith.constant 0 : i32
    return %2, %c0_i32_0 : i32, i32
  }
  func.func @transform_2(%arg0: i32, %arg1: i32) -> (i32, i32, i32) {
    %c0_i32 = arith.constant 0 : i32
    %c0_i32_0 = arith.constant 0 : i32
    %c0_i32_1 = arith.constant 0 : i32
    return %arg0, %c0_i32, %c0_i32_0 : i32, i32, i32
  }
  func.func @transform_3(%arg0: i32, %arg1: i32) -> (i32, i32, i32) {
    %c0_i32 = arith.constant 0 : i32
    %c0_i32_0 = arith.constant 0 : i32
    %c0_i32_1 = arith.constant 0 : i32
    return %arg0, %c0_i32, %c0_i32_0 : i32, i32, i32
  }
  func.func @transform_4(%arg0: i32, %arg1: i32) -> (i32, i32, i32) {
    %c0_i32 = arith.constant 0 : i32
    %c0_i32_0 = arith.constant 0 : i32
    %c0_i32_1 = arith.constant 0 : i32
    return %arg0, %c0_i32, %c0_i32_0 : i32, i32, i32
  }
}

</mosaic_0001>

<llo_original>
// kernel: tpu_custom_call.1
$region0: #{tpu_custom_call.1}
  #allocation0 [shape = 'u32[]', space=smem, size = 0x4, offset = 0x4, fixed_abs, tag = 'smem constant byte address 0x4 - core index']
  #allocation1 [shape = 'u32[144,128]{1,0:T(1,128)}', space=vmem, size = 0x12000, scoped, tag = 'internal scratch']
  #allocation2 [shape = 'f32[16,128]{1,0:T(8,128)}', space=vmem, size = 0x2000, scoped, tag = 'scratch operand']
  #allocation3 [shape = 'f32[16,128]{1,0:T(8,128)}', space=vmem, size = 0x2000, scoped, tag = 'scratch operand']
  #allocation4 [shape = 'f32[16,128]{1,0:T(8,128)}', space=vmem, size = 0x2000, scoped, tag = 'scratch operand']
  %s0 = inlined_call_operand.hbm [shape: f32[16,128], index: 0, kind: input, shape index: {}]
  %s1 = inlined_call_operand.hbm [shape: f32[16,128], index: 1, kind: input, shape index: {}]
  %s2 = inlined_call_operand.vmem [shape: f32[2,1,1], index: 2, kind: output, shape index: {0}]
  %s3 = inlined_call_operand.vmem [shape: f32[2,1,1], index: 3, kind: output, shape index: {1}]
  %s4 = inlined_call_operand.vmem [shape: f32[2,1,1], index: 4, kind: output, shape index: {2}]
  %5 = xla_tuple %s2, %s3, %s4
  %s6 = sld [smem:[#allocation0]]
  $region73: #{tpu_custom_call.1} parent=0
    _
  %s8 = ssub.s32 1, %s6
  %s9 = scalar_select 0, %s8, %s6
  $region1: #{tpu_custom_call.1} parent=0
    #allocation5 [shape = 'u8[16384]{0}', space=vmem, size = 0x4000, scoped, tag = 'input window, operand 0']
    #allocation6 [shape = 's32[2]{0}', space=sflag, size = 0x8, scoped, tag = 'scoped memory for tpu_custom_call.1']
    #allocation7 [shape = 'u8[16384]{0}', space=vmem, size = 0x4000, scoped, tag = 'input window, operand 1']
    #allocation8 [shape = 's32[2]{0}', space=sflag, size = 0x8, scoped, tag = 'scoped memory for tpu_custom_call.1']
    %10 = vsyncpa [#allocation6], 0
    %s11 = scalar_lea.sflag [#allocation6], 1
    %12 = vsyncpa %s11, 0
    %13 = vsyncpa [#allocation8], 0
    %s14 = scalar_lea.sflag [#allocation8], 1
    %15 = vsyncpa %s14, 0
    loop: start=0, step=1, limit=4
    $region2: #{tpu_custom_call.1} parent=1 // loop_pre_header
      _
    $region3: #{tpu_custom_call.1} parent=1 // loop_header
      %s17 = sphi 0, %s21
      %p18 = scmp.ge.s32.totalorder %s17, 4
      %s24 = sphi 0, %s36
      %s25 = sphi 0, %s32
      %s26 = sphi 0, %s24
      %s27 = sphi 0, %s25
      %s28 = sphi 0, %s26
      %s29 = sphi 0, %s27
      %s45 = sphi 0, %s47
      %s48 = sphi 0, %s45
      %s49 = sphi 0, %s48
      %s65 = sphi 0, %s49
      %s77 = sphi 0, %s79
      %s80 = sphi 0, %s77
      %s81 = sphi 0, %s80
      %s97 = sphi 0, %s81
      %s103 = sphi 0, %s105
      %s106 = sphi 0, %s103
      %s107 = sphi 0, %s106
      %s123 = sphi 0, %s107
      %s129 = sphi 0, %s131
      %s132 = sphi 0, %s129
      %s133 = sphi 0, %s132
      %s149 = sphi 0, %s133
      %s155 = sphi 0, %s157
      %s158 = sphi 0, %s155
      %s159 = sphi 0, %s158
      %s175 = sphi 0, %s159
    $region4: #{tpu_custom_call.1} parent=1 // loop_header_branch
      %20 = sbr.rel (%p18) target = $region8
    $region5: #{tpu_custom_call.1} parent=1 // loop_body
      %s22 = ssub.s32 %s17, 1
      %s23 = ssub.s32 %s17, 2
      %s30 = sadd.s32 1, %s25
      %p31 = scmp.ge.s32.totalorder %s30, 1
      %s32 = scalar_select %p31, 0, %s30
      %s33 = sadd.s32 1, %s24
      %s34 = scalar_select %p31, %s33, %s24
      %p35 = scmp.ge.s32.totalorder %s34, 2
      %s36 = scalar_select %p35, 0, %s34
      %s37 = sadd.s32 %s24, %s25
      %p38 = scmp.lt.s32.totalorder %s37, 0
      %s39 = scalar_select %p38, %s37, 0
      %s40 = sadd.s32 %s36, %s32
      %p41 = scmp.lt.s32.totalorder %s40, 0
      %s42 = scalar_select %p41, %s40, 0
      %s43 = ssub.s32 %s39, %s42
      %p44 = scmp.eq.s32.totalorder %s43, 0
      %s46 = sadd.s32 %s45, 1
      %s47 = scalar_select %p44, %s45, %s46
      %p50 = pneg %p44
      %p51 = scmp.eq.s32.totalorder %s17, 1
      %p52 = por %p50, %p51
      %p53 = scmp.ne.s32.totalorder %s45, %s48
      %p54 = scmp.eq.s32.totalorder %s17, 0
      %p55 = por %p53, %p54
      %p56 = scmp.ne.s32.totalorder %s45, %s48
      %p57 = scmp.eq.s32.totalorder %s22, 1
      %p58 = por %p56, %p57
      %p59 = scmp.ne.s32.totalorder %s48, %s49
      %p60 = scmp.eq.s32.totalorder %s22, 0
      %p61 = por %p59, %p60
      %p62 = scmp.ne.s32.totalorder %s48, %s49
      %p63 = scmp.eq.s32.totalorder %s23, 1
      %p64 = por %p62, %p63
      %p66 = scmp.ne.s32.totalorder %s49, %s65
      %p67 = scmp.eq.s32.totalorder %s23, 0
      %p68 = por %p66, %p67
      %s69 = sadd.s32 %s24, %s25
      %p70 = scmp.lt.s32.totalorder %s69, 0
      %s71 = scalar_select %p70, %s69, 0
      %s72 = sadd.s32 %s36, %s32
      %p73 = scmp.lt.s32.totalorder %s72, 0
      %s74 = scalar_select %p73, %s72, 0
      %s75 = ssub.s32 %s71, %s74
      %p76 = scmp.eq.s32.totalorder %s75, 0
      %s78 = sadd.s32 %s77, 1
      %s79 = scalar_select %p76, %s77, %s78
      %p82 = pneg %p76
      %p83 = scmp.eq.s32.totalorder %s17, 1
      %p84 = por %p82, %p83
      %p85 = scmp.ne.s32.totalorder %s77, %s80
      %p86 = scmp.eq.s32.totalorder %s17, 0
      %p87 = por %p85, %p86
      %p88 = scmp.ne.s32.totalorder %s77, %s80
      %p89 = scmp.eq.s32.totalorder %s22, 1
      %p90 = por %p88, %p89
      %p91 = scmp.ne.s32.totalorder %s80, %s81
      %p92 = scmp.eq.s32.totalorder %s22, 0
      %p93 = por %p91, %p92
      %p94 = scmp.ne.s32.totalorder %s80, %s81
      %p95 = scmp.eq.s32.totalorder %s23, 1
      %p96 = por %p94, %p95
      %p98 = scmp.ne.s32.totalorder %s81, %s97
      %p99 = scmp.eq.s32.totalorder %s23, 0
      %p100 = por %p98, %p99
      %s101 = ssub.s32 %s24, %s36
      %p102 = scmp.eq.s32.totalorder %s101, 0
      %s104 = sadd.s32 %s103, 1
      %s105 = scalar_select %p102, %s103, %s104
      %p108 = pneg %p102
      %p109 = scmp.eq.s32.totalorder %s17, 1
      %p110 = por %p108, %p109
      %p111 = scmp.ne.s32.totalorder %s103, %s106
      %p112 = scmp.eq.s32.totalorder %s17, 0
      %p113 = por %p111, %p112
      %p114 = scmp.ne.s32.totalorder %s103, %s106
      %p115 = scmp.eq.s32.totalorder %s22, 1
      %p116 = por %p114, %p115
      %p117 = scmp.ne.s32.totalorder %s106, %s107
      %p118 = scmp.eq.s32.totalorder %s22, 0
      %p119 = por %p117, %p118
      %p120 = scmp.ne.s32.totalorder %s106, %s107
      %p121 = scmp.eq.s32.totalorder %s23, 1
      %p122 = por %p120, %p121
      %p124 = scmp.ne.s32.totalorder %s107, %s123
      %p125 = scmp.eq.s32.totalorder %s23, 0
      %p126 = por %p124, %p125
      %s127 = ssub.s32 %s24, %s36
      %p128 = scmp.eq.s32.totalorder %s127, 0
      %s130 = sadd.s32 %s129, 1
      %s131 = scalar_select %p128, %s129, %s130
      %p134 = pneg %p128
      %p135 = scmp.eq.s32.totalorder %s17, 1
      %p136 = por %p134, %p135
      %p137 = scmp.ne.s32.totalorder %s129, %s132
      %p138 = scmp.eq.s32.totalorder %s17, 0
      %p139 = por %p137, %p138
      %p140 = scmp.ne.s32.totalorder %s129, %s132
      %p141 = scmp.eq.s32.totalorder %s22, 1
      %p142 = por %p140, %p141
      %p143 = scmp.ne.s32.totalorder %s132, %s133
      %p144 = scmp.eq.s32.totalorder %s22, 0
      %p145 = por %p143, %p144
      %p146 = scmp.ne.s32.totalorder %s132, %s133
      %p147 = scmp.eq.s32.totalorder %s23, 1
      %p148 = por %p146, %p147
      %p150 = scmp.ne.s32.totalorder %s133, %s149
      %p151 = scmp.eq.s32.totalorder %s23, 0
      %p152 = por %p150, %p151
      %s153 = ssub.s32 %s24, %s36
      %p154 = scmp.eq.s32.totalorder %s153, 0
      %s156 = sadd.s32 %s155, 1
      %s157 = scalar_select %p154, %s155, %s156
      %p160 = pneg %p154
      %p161 = scmp.eq.s32.totalorder %s17, 1
      %p162 = por %p160, %p161
      %p163 = scmp.ne.s32.totalorder %s155, %s158
      %p164 = scmp.eq.s32.totalorder %s17, 0
      %p165 = por %p163, %p164
      %p166 = scmp.ne.s32.totalorder %s155, %s158
      %p167 = scmp.eq.s32.totalorder %s22, 1
      %p168 = por %p166, %p167
      %p169 = scmp.ne.s32.totalorder %s158, %s159
      %p170 = scmp.eq.s32.totalorder %s22, 0
      %p171 = por %p169, %p170
      %p172 = scmp.ne.s32.totalorder %s158, %s159
      %p173 = scmp.eq.s32.totalorder %s23, 1
      %p174 = por %p172, %p173
      %p176 = scmp.ne.s32.totalorder %s159, %s175
      %p177 = scmp.eq.s32.totalorder %s23, 0
      %p178 = por %p176, %p177
      %p179 = scmp.le.s32.totalorder 1, %s17
      %p180 = scmp.lt.s32.totalorder %s17, 3
      %p181 = pnand %p179, %p180
      %p182 = pneg %p181
      // Predicated region
      $region9: #{tpu_custom_call.1} parent=5 // pred_check
        _
      $region10: #{tpu_custom_call.1} parent=5 // pred_check_branch
        %184 = sbr.rel (%p181) target = $region12
      $region11: #{tpu_custom_call.1} parent=5 // pred_region
        %s185 = ssub.s32 %s17, 1
      $region12: #{tpu_custom_call.1} parent=5 // pred_fallthru
        _
      %p186 = scmp.lt.s32.totalorder %s17, 2
      // Predicated region
      $region13: #{tpu_custom_call.1} parent=5 // pred_check
        %p187 = pneg %p186
      $region14: #{tpu_custom_call.1} parent=5 // pred_check_branch
        %189 = sbr.rel (%p187) target = $region16
      $region15: #{tpu_custom_call.1} parent=5 // pred_region
        // Predicated region
        $region17: #{tpu_custom_call.1} parent=15 // pred_check
          %p190 = pneg %p55
        $region18: #{tpu_custom_call.1} parent=15 // pred_check_branch
          %192 = sbr.rel (%p190) target = $region20
        $region19: #{tpu_custom_call.1} parent=15 // pred_region
          %s193 = sand.u32 %s45, 1
          %s194 = scalar_lea.sflag [#allocation6], %s193
          %s195 = sand.u32 %s45, 1
          %s196 = smul.addr %s195, 16
          %s197 = scalar_lea.vmem [#allocation5], %s196
          %s198 = sadd.s32 %s24, %s25
          %p199 = scmp.lt.s32.totalorder %s198, 0
          %s200 = scalar_select %p199, %s198, 0
          %s201 = smul.u32 2, %s200
          %s203 = ssub.s32 256, 256
          %204 = vsyncadd %s194, %s203
          %s205 = smul.addr %s201, 128
          %s206 = scalar_lea.hbm %s0, %s205
          %s207 = sshll.u32 %s197, 4
          %s208 = int_to_ptr.vmem [resolvable:$true] %s207
          %213 = dma.hbm_to_vmem [thread:$0]  %s206, 256, %s208, %s194, 128, 128, 8
        $region20: #{tpu_custom_call.1} parent=15 // pred_fallthru
          _
        // Predicated region
        $region21: #{tpu_custom_call.1} parent=15 // pred_check
          %p214 = pneg %p87
        $region22: #{tpu_custom_call.1} parent=15 // pred_check_branch
          %216 = sbr.rel (%p214) target = $region24
        $region23: #{tpu_custom_call.1} parent=15 // pred_region
          %s217 = sand.u32 %s77, 1
          %s218 = scalar_lea.sflag [#allocation8], %s217
          %s219 = sand.u32 %s77, 1
          %s220 = smul.addr %s219, 16
          %s221 = scalar_lea.vmem [#allocation7], %s220
          %s222 = sadd.s32 %s24, %s25
          %p223 = scmp.lt.s32.totalorder %s222, 0
          %s224 = scalar_select %p223, %s222, 0
          %s225 = smul.u32 2, %s224
          %s227 = ssub.s32 256, 256
          %228 = vsyncadd %s218, %s227
          %s229 = smul.addr %s225, 128
          %s230 = scalar_lea.hbm %s1, %s229
          %s231 = sshll.u32 %s221, 4
          %s232 = int_to_ptr.vmem [resolvable:$true] %s231
          %237 = dma.hbm_to_vmem [thread:$0]  %s230, 256, %s232, %s218, 128, 128, 8
        $region24: #{tpu_custom_call.1} parent=15 // pred_fallthru
          _
      $region16: #{tpu_custom_call.1} parent=5 // pred_fallthru
        _
      %p238 = scmp.le.s32.totalorder 1, %s17
      %p239 = scmp.lt.s32.totalorder %s17, 3
      %p240 = pnand %p238, %p239
      %p241 = pneg %p240
      // Predicated region
      $region25: #{tpu_custom_call.1} parent=5 // pred_check
        _
      $region26: #{tpu_custom_call.1} parent=5 // pred_check_branch
        %243 = sbr.rel (%p240) target = $region28
      $region27: #{tpu_custom_call.1} parent=5 // pred_region
        %s244 = ssub.s32 %s17, 1
        %s245 = sand.u32 %s48, 1
        %s246 = scalar_lea.sflag [#allocation6], %s245
        %s247 = sand.u32 %s48, 1
        %s248 = smul.addr %s247, 16
        %s249 = scalar_lea.vmem [#allocation5], %s248
        // Predicated region
        $region29: #{tpu_custom_call.1} parent=27 // pred_check
          %p250 = pneg %p61
        $region30: #{tpu_custom_call.1} parent=27 // pred_check_branch
          %252 = sbr.rel (%p250) target = $region32
        $region31: #{tpu_custom_call.1} parent=27 // pred_region
          %253 = dma.done %s246, 256
        $region32: #{tpu_custom_call.1} parent=27 // pred_fallthru
          _
        %s254 = sand.u32 %s80, 1
        %s255 = scalar_lea.sflag [#allocation8], %s254
        %s256 = sand.u32 %s80, 1
        %s257 = smul.addr %s256, 16
        %s258 = scalar_lea.vmem [#allocation7], %s257
        // Predicated region
        $region33: #{tpu_custom_call.1} parent=27 // pred_check
          %p259 = pneg %p93
        $region34: #{tpu_custom_call.1} parent=27 // pred_check_branch
          %261 = sbr.rel (%p259) target = $region36
        $region35: #{tpu_custom_call.1} parent=27 // pred_region
          %262 = dma.done %s255, 256
        $region36: #{tpu_custom_call.1} parent=27 // pred_fallthru
          _
        %s263 = sand.u32 %s48, 1
        %s264 = scalar_lea.sflag [#allocation6], %s263
        %s265 = sand.u32 %s48, 1
        %s266 = smul.addr %s265, 16
        %s267 = scalar_lea.vmem [#allocation5], %s266
        %p268 = pneg %p61
        %p269 = pneg %p58
        %s270 = sand.u32 %s80, 1
        %s271 = scalar_lea.sflag [#allocation8], %s270
        %s272 = sand.u32 %s80, 1
        %s273 = smul.addr %s272, 16
        %s274 = scalar_lea.vmem [#allocation7], %s273
        %p275 = pneg %p93
        %p276 = pneg %p90
        %p277 = pneg %p119
        %p278 = pneg %p116
        %p279 = scmp.lt.s32.totalorder %s26, 1
        %s280 = scalar_select %p279, %s26, 1
        %s281 = scalar_lea.vmem %s2, %s280
        %p282 = pneg %p145
        %p283 = pneg %p142
        %p284 = scmp.lt.s32.totalorder %s26, 1
        %s285 = scalar_select %p284, %s26, 1
        %s286 = scalar_lea.vmem %s3, %s285
        %p287 = pneg %p171
        %p288 = pneg %p168
        %p289 = scmp.lt.s32.totalorder %s26, 1
        %s290 = scalar_select %p289, %s26, 1
        %s291 = scalar_lea.vmem %s4, %s290
        %s292 = sadd.s32 %s26, %s27
        %p293 = scmp.lt.s32.totalorder %s292, 0
        %s294 = scalar_select %p293, %s292, 0
        %s295 = smul.u32 2, %s294
        %s296 = sadd.s32 %s26, %s27
        %p297 = scmp.lt.s32.totalorder %s296, 0
        %s298 = scalar_select %p297, %s296, 0
        %s299 = smul.u32 2, %s298
        %p300 = scmp.lt.s32.totalorder %s26, 1
        %s301 = scalar_select %p300, %s26, 1
        %s302 = scalar_lea.vmem %s2, %s301
        %p303 = scmp.lt.s32.totalorder %s26, 1
        %s304 = scalar_select %p303, %s26, 1
        %s305 = scalar_lea.vmem %s3, %s304
        %p306 = scmp.lt.s32.totalorder %s26, 1
        %s307 = scalar_select %p306, %s26, 1
        %s308 = scalar_lea.vmem %s4, %s307
        %p309 = scmp.eq.s32.totalorder %s27, 0
        // Predicated region
        $region37: #{tpu_custom_call.1} parent=27 // pred_check
          %p310 = pneg %p309
        $region38: #{tpu_custom_call.1} parent=27 // pred_check_branch
          %312 = sbr.rel (%p310) target = $region40
        $region39: #{tpu_custom_call.1} parent=27 // pred_region
          %313 = vst [vmem:[#allocation2] sm:$0xff] 0.0
          %314 = vst [vmem:[#allocation2 + $0x8] sm:$0xff] 0.0
          %315 = vst [vmem:[#allocation3] sm:$0xff] 0.0
          %316 = vst [vmem:[#allocation3 + $0x8] sm:$0xff] 0.0
          %317 = vst [vmem:[#allocation4] sm:$0xff] 0.0
          %318 = vst [vmem:[#allocation4 + $0x8] sm:$0xff] 0.0
        $region40: #{tpu_custom_call.1} parent=27 // pred_fallthru
          _
        %s319 = sadd.s32 %s26, %s27
        %s320 = smul.u32 %s319, 2048
        %v321 = vlaneseq
        %v322 = vshrl.u32 %v321, 7
        %v323 = vadd.s32 %v322, 8
        %v324 = vlaneseq
        %v325 = vand.u32 %v324, 127
        %v326 = vmul.u32 %v322, 128
        %v327 = vmul.u32 %v323, 128
        %v328 = vstv %s320
        %v329 = vadd.s32 %v328, %v326
        %v330 = vadd.s32 %v328, %v327
        %v331 = vadd.s32 %v329, %v325
        %v332 = vadd.s32 %v330, %v325
        %vm333 = vcmp.lt.s32.totalorder %v331, 2048
        %vm334 = vcmp.lt.s32.totalorder %v332, 2048
        %v335 = vld [vmem:[%s249] sm:$0xff]
        %v336 = vld [vmem:[%s249 + $0x8] sm:$0xff]
        %v337 = vsel %vm333, %v335, 0.0
        %v338 = vsel %vm334, %v336, 0.0
        %v339 = vld [vmem:[%s258] sm:$0xff]
        %v340 = vld [vmem:[%s258 + $0x8] sm:$0xff]
        %v341 = vsel %vm333, %v339, 0.0
        %v342 = vsel %vm334, %v340, 0.0
        %v343 = vlog2.pop %v337
        %v344 = vmul.f32 %v343, 0.6931472
        %v345 = vlog2.pop %v338
        %v346 = vmul.f32 %v345, 0.6931472
        %v347 = vmax.f32 %v344, -100.0
        %v348 = vmax.f32 %v346, -100.0
        %v349 = vsub.f32 1.0, %v337
        %v350 = vsub.f32 1.0, %v338
        %v351 = vlog2.pop %v349
        %v352 = vmul.f32 %v351, 0.6931472
        %v353 = vlog2.pop %v350
        %v354 = vmul.f32 %v353, 0.6931472
        %v355 = vmax.f32 %v352, -100.0
        %v356 = vmax.f32 %v354, -100.0
        %v357 = vmul.f32 %v341, %v347
        %v358 = vmul.f32 %v342, %v348
        %v359 = vsub.f32 1.0, %v341
        %v360 = vsub.f32 1.0, %v342
        %v361 = vmul.f32 %v359, %v355
        %v362 = vmul.f32 %v360, %v356
        %v363 = vadd.f32 %v357, %v361
        %v364 = vadd.f32 %v358, %v362
        %v365 = vsub.f32 0.0, %v363
        %v366 = vsub.f32 0.0, %v364
        %v367 = vsel %vm333, %v365, 0.0
        %v368 = vsel %vm334, %v366, 0.0
        %v369 = vld [vmem:[#allocation2] sm:$0xff]
        %v370 = vld [vmem:[#allocation2 + $0x8] sm:$0xff]
        %v371 = vadd.f32 %v369, %v367
        %v372 = vadd.f32 %v370, %v368
        %373 = vst [vmem:[#allocation2] sm:$0xff] %v371
        %374 = vst [vmem:[#allocation2 + $0x8] sm:$0xff] %v372
        %v375 = vld [vmem:[#allocation3] sm:$0xff]
        %v376 = vld [vmem:[#allocation3 + $0x8] sm:$0xff]
        %v377 = vmul.f32 %v337, %v341
        %v378 = vmul.f32 %v338, %v342
        %v379 = vadd.f32 %v375, %v377
        %v380 = vadd.f32 %v376, %v378
        %381 = vst [vmem:[#allocation3] sm:$0xff] %v379
        %382 = vst [vmem:[#allocation3 + $0x8] sm:$0xff] %v380
        %v383 = vld [vmem:[#allocation4] sm:$0xff]
        %v384 = vld [vmem:[#allocation4 + $0x8] sm:$0xff]
        %v385 = vadd.f32 %v337, %v341
        %v386 = vadd.f32 %v338, %v342
        %v387 = vadd.f32 %v383, %v385
        %v388 = vadd.f32 %v384, %v386
        %389 = vst [vmem:[#allocation4] sm:$0xff] %v387
        %390 = vst [vmem:[#allocation4 + $0x8] sm:$0xff] %v388
        // Predicated region
        $region41: #{tpu_custom_call.1} parent=27 // pred_check
          %p391 = pneg %p309
        $region42: #{tpu_custom_call.1} parent=27 // pred_check_branch
          %393 = sbr.rel (%p391) target = $region44
        $region43: #{tpu_custom_call.1} parent=27 // pred_region
          %v394 = vld [vmem:[#allocation2] sm:$0xff]
          %v395 = vld [vmem:[#allocation2 + $0x8] sm:$0xff]
          %v396 = vadd.f32 %v394, %v395
          %397 = vadd.xlane.f32.xlu0 %v396
          %v398 = vpop.xlane.xlu0 %397
          %v399 = vrot.slane %v398, 4
          %v400 = vadd.f32 %v398, %v399
          %v401 = vrot.slane %v400, 2
          %v402 = vadd.f32 %v400, %v401
          %v403 = vrot.slane %v402, 1
          %v404 = vadd.f32 %v402, %v403
          %s405 = vtos %v404
          %v406 = vstv %s405
          %vm407 = vcmask 0
          %408 = vst.msk [vmem:[%s302] sm:$0x1] %vm407, %v406
          %v409 = vld [vmem:[#allocation3] sm:$0xff]
          %v410 = vld [vmem:[#allocation3 + $0x8] sm:$0xff]
          %v411 = vadd.f32 %v409, %v410
          %412 = vadd.xlane.f32.xlu0 %v411
          %v413 = vpop.xlane.xlu0 %412
          %v414 = vrot.slane %v413, 4
          %v415 = vadd.f32 %v413, %v414
          %v416 = vrot.slane %v415, 2
          %v417 = vadd.f32 %v415, %v416
          %v418 = vrot.slane %v417, 1
          %v419 = vadd.f32 %v417, %v418
          %s420 = vtos %v419
          %v421 = vstv %s420
          %422 = vst.msk [vmem:[%s305] sm:$0x1] %vm407, %v421
          %v423 = vld [vmem:[#allocation4] sm:$0xff]
          %v424 = vld [vmem:[#allocation4 + $0x8] sm:$0xff]
          %v425 = vadd.f32 %v423, %v424
          %426 = vadd.xlane.f32.xlu0 %v425
          %v427 = vpop.xlane.xlu0 %426
          %v428 = vrot.slane %v427, 4
          %v429 = vadd.f32 %v427, %v428
          %v430 = vrot.slane %v429, 2
          %v431 = vadd.f32 %v429, %v430
          %v432 = vrot.slane %v431, 1
          %v433 = vadd.f32 %v431, %v432
          %s434 = vtos %v433
          %v435 = vstv %s434
          %436 = vst.msk [vmem:[%s308] sm:$0x1] %vm407, %v435
        $region44: #{tpu_custom_call.1} parent=27 // pred_fallthru
          _
        %p437 = scmp.lt.s32.totalorder %s26, 1
        %s438 = scalar_select %p437, %s26, 1
        %s439 = scalar_lea.vmem %s2, %s438
        %p440 = scmp.lt.s32.totalorder %s26, 1
        %s441 = scalar_select %p440, %s26, 1
        %s442 = scalar_lea.vmem %s3, %s441
        %p443 = scmp.lt.s32.totalorder %s26, 1
        %s444 = scalar_select %p443, %s26, 1
        %s445 = scalar_lea.vmem %s4, %s444
        // Predicated region
        $region45: #{tpu_custom_call.1} parent=27 // pred_check
          %p446 = pneg %p116
        $region46: #{tpu_custom_call.1} parent=27 // pred_check_branch
          %448 = sbr.rel (%p446) target = $region48
        $region47: #{tpu_custom_call.1} parent=27 // pred_region
          _
        $region48: #{tpu_custom_call.1} parent=27 // pred_fallthru
          _
        // Predicated region
        $region49: #{tpu_custom_call.1} parent=27 // pred_check
          %p449 = pneg %p142
        $region50: #{tpu_custom_call.1} parent=27 // pred_check_branch
          %451 = sbr.rel (%p449) target = $region52
        $region51: #{tpu_custom_call.1} parent=27 // pred_region
          _
        $region52: #{tpu_custom_call.1} parent=27 // pred_fallthru
          _
        // Predicated region
        $region53: #{tpu_custom_call.1} parent=27 // pred_check
          %p452 = pneg %p168
        $region54: #{tpu_custom_call.1} parent=27 // pred_check_branch
          %454 = sbr.rel (%p452) target = $region56
        $region55: #{tpu_custom_call.1} parent=27 // pred_region
          _
        $region56: #{tpu_custom_call.1} parent=27 // pred_fallthru
          _
      $region28: #{tpu_custom_call.1} parent=5 // pred_fallthru
        _
      %p455 = scmp.le.s32.totalorder 2, %s17
      // Predicated region
      $region57: #{tpu_custom_call.1} parent=5 // pred_check
        %p456 = pneg %p455
      $region58: #{tpu_custom_call.1} parent=5 // pred_check_branch
        %458 = sbr.rel (%p456) target = $region60
      $region59: #{tpu_custom_call.1} parent=5 // pred_region
        %s459 = ssub.s32 %s17, 2
        // Predicated region
        $region61: #{tpu_custom_call.1} parent=59 // pred_check
          %p460 = pneg %p122
        $region62: #{tpu_custom_call.1} parent=59 // pred_check_branch
          %462 = sbr.rel (%p460) target = $region64
        $region63: #{tpu_custom_call.1} parent=59 // pred_region
          %p463 = scmp.lt.s32.totalorder %s28, 1
          %s464 = scalar_select %p463, %s28, 1
          %s465 = scalar_lea.vmem %s2, %s464
        $region64: #{tpu_custom_call.1} parent=59 // pred_fallthru
          _
        // Predicated region
        $region65: #{tpu_custom_call.1} parent=59 // pred_check
          %p466 = pneg %p148
        $region66: #{tpu_custom_call.1} parent=59 // pred_check_branch
          %468 = sbr.rel (%p466) target = $region68
        $region67: #{tpu_custom_call.1} parent=59 // pred_region
          %p469 = scmp.lt.s32.totalorder %s28, 1
          %s470 = scalar_select %p469, %s28, 1
          %s471 = scalar_lea.vmem %s3, %s470
        $region68: #{tpu_custom_call.1} parent=59 // pred_fallthru
          _
        // Predicated region
        $region69: #{tpu_custom_call.1} parent=59 // pred_check
          %p472 = pneg %p174
        $region70: #{tpu_custom_call.1} parent=59 // pred_check_branch
          %474 = sbr.rel (%p472) target = $region72
        $region71: #{tpu_custom_call.1} parent=59 // pred_region
          %p475 = scmp.lt.s32.totalorder %s28, 1
          %s476 = scalar_select %p475, %s28, 1
          %s477 = scalar_lea.vmem %s4, %s476
        $region72: #{tpu_custom_call.1} parent=59 // pred_fallthru
          _
      $region60: #{tpu_custom_call.1} parent=5 // pred_fallthru
        _
    $region6: #{tpu_custom_call.1} parent=1 // loop_footer
      %s21 = sadd.s32 1, %s17
    $region7: #{tpu_custom_call.1} parent=1 // loop_footer_branch
      %16 = sbr.rel target = $region3
    $region8: #{tpu_custom_call.1} parent=1 // loop_exit
      _
    %478 = vsyncpa [#allocation6], 1
    %s479 = scalar_lea.sflag [#allocation6], 1
    %480 = vsyncpa %s479, 1
    %481 = vsyncpa [#allocation8], 1
    %s482 = scalar_lea.sflag [#allocation8], 1
    %483 = vsyncpa %s482, 1

</llo_original>
